<compile_context>
chip_gen: v5e
topology: v5e:2x2
jax: 0.10.0
libtpu: 0.0.40
codegen_flags: <defaults>
</compile_context>

<pallas_src>
import math
import functools

import jax
import jax.numpy as jnp
from jax import lax
from jax.experimental import pallas as pl
from jax.experimental.pallas import tpu as pltpu


# ----------------------------------------------------------------------------
# Glue: positional encoding table (identical math to PositionEncode.forward)
# ----------------------------------------------------------------------------
def position_encode(B, h, w, d_model):
    div_term = jnp.exp(
        jnp.arange(0, d_model, 2, dtype=jnp.float32)
        * (-(math.log(10000.0) / d_model))
    )  # (d_model/2,)
    x_pos = jnp.arange(w, dtype=jnp.float32)
    y_pos = jnp.arange(h, dtype=jnp.float32)

    sx = jnp.sin(x_pos[None, :] * div_term[:, None])  # (d/2, w)
    cx = jnp.cos(x_pos[None, :] * div_term[:, None])
    x = jnp.zeros((d_model, w), jnp.float32).at[0::2].set(sx).at[1::2].set(cx)
    x = jnp.broadcast_to(x[:, None, :], (d_model, h, w))

    sy = jnp.sin(y_pos[None, :] * div_term[:, None])  # (d/2, h)
    cy = jnp.cos(y_pos[None, :] * div_term[:, None])
    y = jnp.zeros((d_model, h), jnp.float32).at[0::2].set(sy).at[1::2].set(cy)
    y = jnp.broadcast_to(y[:, :, None], (d_model, h, w))

    pos = jnp.concatenate([x, y], axis=0)  # (2*d_model, h, w)
    return jnp.broadcast_to(pos[None], (B, 2 * d_model, h, w))


# ----------------------------------------------------------------------------
# Glue: bilinear resize (F.interpolate, mode='bilinear', align_corners=False)
# ----------------------------------------------------------------------------
def bilinear_resize(img, H_out, W_out):
    # TODO(synk): gather-based resize kept in plain JAX (data-dependent gather
    # has no clean rectangular-tile Pallas expression).
    B, C, H_in, W_in = img.shape

    def coords(out_size, in_size):
        scale = in_size / out_size
        src = (jnp.arange(out_size, dtype=jnp.float32) + 0.5) * scale - 0.5
        src = jnp.clip(src, 0.0, in_size - 1)
        lo = jnp.floor(src).astype(jnp.int32)
        hi = jnp.minimum(lo + 1, in_size - 1)
        frac = src - lo.astype(jnp.float32)
        return lo, hi, frac

    ylo, yhi, yf = coords(H_out, H_in)
    xlo, xhi, xf = coords(W_out, W_in)

    top = img[:, :, ylo, :]
    bot = img[:, :, yhi, :]
    row = top * (1.0 - yf)[None, None, :, None] + bot * yf[None, None, :, None]
    left = row[:, :, :, xlo]
    right = row[:, :, :, xhi]
    return left * (1.0 - xf)[None, None, None, :] + right * xf[None, None, None, :]


# ----------------------------------------------------------------------------
# Pallas kernel 1: row-tiled fused matmul+add   out = x @ w + p
#   Used (a) once to precompute the positional 1x1 conv and (b) per call to
#   fuse img_conv + comp_conv into a single lane-dense (Cout=128) matmul.
# ----------------------------------------------------------------------------
def _mm_add_kernel(x_ref, w_ref, p_ref, o_ref):
    o_ref[...] = (
        jnp.dot(x_ref[...], w_ref[...], preferred_element_type=jnp.float32)
        + p_ref[...]
    )


def matmul_rows_add(x, w, p, *, tm=256):
    N, K = x.shape
    Cout = w.shape[1]
    if N % tm != 0:            # fall back to a single row block (fine at toy N)
        tm = N
    return pl.pallas_call(
        _mm_add_kernel,
        out_shape=jax.ShapeDtypeStruct((N, Cout), jnp.float32),
        grid=(N // tm,),
        in_specs=[
            pl.BlockSpec((tm, K), lambda i: (i, 0)),
            pl.BlockSpec((K, Cout), lambda i: (0, 0)),
            pl.BlockSpec((tm, Cout), lambda i: (i, 0)),
        ],
        out_specs=pl.BlockSpec((tm, Cout), lambda i: (i, 0)),
        compiler_params=pltpu.CompilerParams(dimension_semantics=("parallel",)),
    )(x, w, p)


# ----------------------------------------------------------------------------
# Pallas kernel 2: ECRF core (channels-last layout, single invocation)
#   em_pad : (B, H+4, W+4, C2)  embedding, channels on lanes
#   inp_pad: (B, H+4, W+4, C_f) compatibility features, channels on lanes
#   cs_pad : (B, H+4, W+4, 1)   sigmoid(comp_conv(inp)) on the padded plane
#   out    : (B, H, W, C_f)
# Implements unfold(k=3, dilation=2, pad=2, stride=1) + per-pixel feature
# score + phi = comp * feature + weighted sum, band-by-band to bound vregs.
# ----------------------------------------------------------------------------
def _ecrf_core_kernel(em_ref, inp_ref, cs_ref, out_ref):
    B, Hp, Wp, _ = em_ref.shape
    C_f = inp_ref.shape[-1]
    H, W = Hp - 4, Wp - 4
    RB = min(4, H)  # row band: keeps live values well under the 64-vreg file

    for b in range(B):
        for h0 in range(0, H, RB):
            rb = min(RB, H - h0)
            # center embedding for this band (rb, W, C2); reused by all 9 taps
            em_c = em_ref[b, 2 + h0:2 + h0 + rb, 2:2 + W, :]

            def ki_body(ki, acc):
                # dynamic offset only on the untiled leading (H) dim
                r0 = h0 + 2 * ki
                for kj in range(3):          # static sublane offsets 0/2/4
                    c0 = 2 * kj
                    em_k = em_ref[b, pl.ds(r0, rb), c0:c0 + W, :]
                    # channel reduce on the lane axis -> XLU, not VALU
                    fs = jnp.sum(em_k * em_c, axis=-1, keepdims=True)  # (rb,W,1)
                    cs = cs_ref[b, pl.ds(r0, rb), c0:c0 + W, :]        # (rb,W,1)
                    inp_k = inp_ref[b, pl.ds(r0, rb), c0:c0 + W, :]    # (rb,W,C_f)
                    acc = acc + inp_k * (cs * fs)
                return acc

            acc = lax.fori_loop(
                0, 3, ki_body, jnp.zeros((rb, W, C_f), jnp.float32))
            out_ref[b, h0:h0 + rb, :, :] = acc


def ecrf_core(em_pad, inp_pad, cs_pad):
    B, Hp, Wp, _ = em_pad.shape
    C_f = inp_pad.shape[-1]
    H, W = Hp - 4, Wp - 4
    return pl.pallas_call(
        _ecrf_core_kernel,
        out_shape=jax.ShapeDtypeStruct((B, H, W, C_f), jnp.float32),
        in_specs=[pl.BlockSpec(memory_space=pltpu.MemorySpace.VMEM)] * 3,
        out_specs=pl.BlockSpec(memory_space=pltpu.MemorySpace.VMEM),
    )(em_pad, inp_pad, cs_pad)


# ----------------------------------------------------------------------------
# Precompute: positional branch (depends only on shapes + fixed pos weights)
# ----------------------------------------------------------------------------
def precompute_position_features(B, H, W, channel, W_pos_t):
    pos = position_encode(B, H, W, channel)                     # (B, 2C, H, W)
    N = B * H * W
    pos_flat = pos.transpose(0, 2, 3, 1).reshape(N, 2 * channel)
    zero = jnp.zeros((N, channel), jnp.float32)
    return matmul_rows_add(pos_flat, W_pos_t, zero)              # (N, channel)


# ----------------------------------------------------------------------------
# Full ECRF forward
# ----------------------------------------------------------------------------
@functools.partial(jax.jit, static_argnames=("channel",))
def ecrf_forward(inp, img, pos_feat, params, *, channel=32):
    B, C_f, H, W = inp.shape
    W_img_t = params["img"]    # (3, channel)      == img_conv.weight.T
    W_comp = params["comp"]    # (C_f,)            == comp_conv.weight
    C2 = 2 * channel
    N = B * H * W
    COUT = 128                 # lane-dense fused output: [em(64) | s(1) | 0...]
    assert C2 + 1 <= COUT

    # fused front end: one matmul over X=[resized_img(3) | inp(C_f)] producing
    # img_feat (cols 0..channel-1), comp preactivation (col C2); pos_feat is
    # folded in via the additive term (cols channel..C2-1).
    rimg = bilinear_resize(img, H, W)                            # (B, 3, H, W)
    x_img = rimg.transpose(0, 2, 3, 1).reshape(N, 3)
    x_inp = inp.transpose(0, 2, 3, 1).reshape(N, C_f)
    X = jnp.concatenate([x_img, x_inp], axis=1)                  # (N, 3+C_f)

    Wf = jnp.zeros((3 + C_f, COUT), jnp.float32)
    Wf = Wf.at[:3, :channel].set(W_img_t)
    Wf = Wf.at[3:, C2].set(W_comp)

    P = jnp.zeros((N, COUT), jnp.float32)
    P = P.at[:, channel:C2].set(pos_feat)

    Y = matmul_rows_add(X, Wf, P).reshape(B, H, W, COUT)
    em = Y[..., :C2]                                             # (B, H, W, 64)
    s = Y[..., C2:C2 + 1]                                        # (B, H, W, 1)

    pad = ((0, 0), (2, 2), (2, 2), (0, 0))
    em_pad = jnp.pad(em, pad)
    # sigmoid once on the padded plane; sigmoid(0)=0.5 at border taps matches
    # torch's comp_score on zero-padded unfold (and those taps contribute 0).
    cs_pad = jax.nn.sigmoid(jnp.pad(s, pad))
    inp_pad = jnp.pad(inp.transpose(0, 2, 3, 1), pad)

    out_nhwc = ecrf_core(em_pad, inp_pad, cs_pad)                # (B, H, W, C_f)
    return out_nhwc.transpose(0, 3, 1, 2)                        # (B, C_f, H, W)


# ----------------------------------------------------------------------------
# Pure-JAX reference (mirrors the PyTorch module) for a correctness check
# ----------------------------------------------------------------------------
def ecrf_reference(inp, img, pos_feat, params, *, channel=32):
    B, C_f, H, W = inp.shape
    rimg = bilinear_resize(img, H, W)
    img_feat = jnp.einsum("bchw,cd->bdhw", rimg, params["img"])
    pos_f = pos_feat.reshape(B, H, W, channel).transpose(0, 3, 1, 2)
    em = jnp.concatenate([img_feat, pos_f], axis=1)              # (B, 2C, H, W)
    em_pad = jnp.pad(em, ((0, 0), (0, 0), (2, 2), (2, 2)))
    inp_pad = jnp.pad(inp, ((0, 0), (0, 0), (2, 2), (2, 2)))
    s_pad = jnp.pad(jnp.einsum("bchw,c->bhw", inp, params["comp"]),
                    ((0, 0), (2, 2), (2, 2)))
    out = jnp.zeros_like(inp)
    for ki in range(3):
        for kj in range(3):
            em_k = em_pad[:, :, 2 * ki:2 * ki + H, 2 * kj:2 * kj + W]
            fs = jnp.sum(em_k * em, axis=1)
            cs = jax.nn.sigmoid(s_pad[:, 2 * ki:2 * ki + H, 2 * kj:2 * kj + W])
            inp_k = inp_pad[:, :, 2 * ki:2 * ki + H, 2 * kj:2 * kj + W]
            out = out + inp_k * (cs * fs)[:, None]
    return out


# ----------------------------------------------------------------------------
# main
# ----------------------------------------------------------------------------
if __name__ == "__main__":
    B = 2
    compability_channel = 4   # channels of `inp`
    channel = 32
    H_f = W_f = 16
    H_img = W_img = 32

    key = jax.random.PRNGKey(0)
    k_inp, k_img, k_wp, k_wi, k_wc = jax.random.split(key, 5)

    inp = jax.random.normal(k_inp, (B, compability_channel, H_f, W_f), jnp.float32)
    img = jax.random.normal(k_img, (B, 3, H_img, W_img), jnp.float32)

    # Conv weights stored transposed for matmul (all convs are bias=False).
    params = {
        "pos": 0.1 * jax.random.normal(k_wp, (2 * channel, channel), jnp.float32),
        "img": 0.1 * jax.random.normal(k_wi, (3, channel), jnp.float32),
        "comp": 0.1 * jax.random.normal(k_wc, (compability_channel,), jnp.float32),
    }

    # Positional branch hoisted out of the forward pass (shape-only constant).
    pos_feat = precompute_position_features(B, H_f, W_f, channel, params["pos"])

    out = ecrf_forward(inp, img, pos_feat, params, channel=channel)
    out = jax.block_until_ready(out)
    assert out.shape == (B, compability_channel, H_f, W_f), out.shape
    assert out.dtype == jnp.float32

    ref = ecrf_reference(inp, img, pos_feat, params, channel=channel)
    err = float(jnp.max(jnp.abs(out - ref)))
    assert jnp.allclose(out, ref, rtol=1e-2, atol=1e-2), f"max|err|={err}"

    print("KERNEL_OK")
</pallas_src>

<mosaic_0001>
module attributes {stable_mosaic.version = 11 : i64} {
  func.func @_mm_add_kernel(%arg0: i32, %arg1: memref<256x64xf32, #tpu.memory_space<vmem>>, %arg2: memref<64x32xf32, #tpu.memory_space<vmem>>, %arg3: memref<256x32xf32, #tpu.memory_space<vmem>>, %arg4: memref<256x32xf32, #tpu.memory_space<vmem>>) attributes {dimension_semantics = [#tpu.dimension_semantics<parallel>], iteration_bounds = array<i64: 2>, scalar_prefetch = 0 : i64, scratch_operands = 0 : i64, tpu.core_type = #tpu.core_type<tc>, window_params = [{transform_indices = @transform_0, window_bounds = array<i64: 256, 64>}, {pipeline_mode = #tpu.pipeline_mode<synchronous>, transform_indices = @transform_1, window_bounds = array<i64: 64, 32>}, {transform_indices = @transform_2, window_bounds = array<i64: 256, 32>}, {transform_indices = @transform_3, window_bounds = array<i64: 256, 32>}]} {
    %c0 = arith.constant 0 : index
    %c0_0 = arith.constant 0 : index
    %0 = vector.load %arg1[%c0, %c0_0] : memref<256x64xf32, #tpu.memory_space<vmem>>, vector<256x64xf32>
    %c0_1 = arith.constant 0 : index
    %c0_2 = arith.constant 0 : index
    %1 = vector.load %arg2[%c0_1, %c0_2] : memref<64x32xf32, #tpu.memory_space<vmem>>, vector<64x32xf32>
    %cst = arith.constant dense<0.000000e+00> : vector<256x32xf32>
    %2 = tpu.matmul %0, %1, %cst {dimension_numbers = #tpu.dot_dimension_numbers<[1], [0], [0], [1], [0, 0, 1, 1], [], []>} : vector<256x64xf32>, vector<64x32xf32>, vector<256x32xf32> -> vector<256x32xf32>
    %c0_3 = arith.constant 0 : index
    %c0_4 = arith.constant 0 : index
    %3 = vector.load %arg3[%c0_3, %c0_4] : memref<256x32xf32, #tpu.memory_space<vmem>>, vector<256x32xf32>
    %4 = arith.addf %2, %3 : vector<256x32xf32>
    %c0_5 = arith.constant 0 : index
    %c0_6 = arith.constant 0 : index
    %5 = vector.load %arg4[%c0_5, %c0_6] : memref<256x32xf32, #tpu.memory_space<vmem>>, vector<256x32xf32>
    tpu.vector_store %arg4[%c0_5, %c0_6], %4 {strides = array<i32>} : memref<256x32xf32, #tpu.memory_space<vmem>>, vector<256x32xf32>,
    return
  }
  func.func @transform_0(%arg0: i32) -> (i32, i32) {
    %c0_i32 = arith.constant 0 : i32
    %c0_i32_0 = arith.constant 0 : i32
    return %arg0, %c0_i32 : i32, i32
  }
  func.func @transform_1(%arg0: i32) -> (i32, i32) {
    %c0_i32 = arith.constant 0 : i32
    %c0_i32_0 = arith.constant 0 : i32
    %c0_i32_1 = arith.constant 0 : i32
    return %c0_i32, %c0_i32_0 : i32, i32
  }
  func.func @transform_2(%arg0: i32) -> (i32, i32) {
    %c0_i32 = arith.constant 0 : i32
    %c0_i32_0 = arith.constant 0 : i32
    return %arg0, %c0_i32 : i32, i32
  }
  func.func @transform_3(%arg0: i32) -> (i32, i32) {
    %c0_i32 = arith.constant 0 : i32
    %c0_i32_0 = arith.constant 0 : i32
    return %arg0, %c0_i32 : i32, i32
  }
}

</mosaic_0001>

<llo_original>
// kernel: tpu_custom_call.1
$region0: #{tpu_custom_call.1}
  #allocation0 [shape = 'u32[]', space=smem, size = 0x4, offset = 0x4, fixed_abs, tag = 'smem constant byte address 0x4 - core index']
  #allocation1 [shape = 'u32[72,128]{1,0:T(1,128)}', space=vmem, size = 0x9000, scoped, tag = 'internal scratch']
  %s0 = inlined_call_operand.vmem [shape: f32[512,64], index: 0, kind: input, shape index: {}]
  %s1 = inlined_call_operand.vmem [shape: f32[64,32], index: 1, kind: input, shape index: {}]
  %s2 = inlined_call_operand.vmem [shape: f32[512,32], index: 2, kind: input, shape index: {}]
  %s3 = inlined_call_operand.vmem [shape: f32[512,32], index: 3, kind: output, shape index: {}]
  %s4 = sld [smem:[#allocation0]]
  $region45: #{tpu_custom_call.1} parent=0
    _
  %s6 = ssub.s32 1, %s4
  %s7 = scalar_select 0, %s6, %s4
  loop: start=0, step=1, limit=4
  $region2: #{tpu_custom_call.1} parent=0 // loop_pre_header
    _
  $region3: #{tpu_custom_call.1} parent=0 // loop_header
    %s9 = sphi 0, %s13
    %p10 = scmp.ge.s32.totalorder %s9, 4
    %s19 = sphi 0, %s21
    %s22 = sphi 0, %s19
    %s23 = sphi 0, %s22
    %s39 = sphi 0, %s23
    %s43 = sphi 0, %s43
    %s45 = sphi 0, %s43
    %s46 = sphi 0, %s45
    %s60 = sphi 0, %s46
    %s66 = sphi 0, %s68
    %s69 = sphi 0, %s66
    %s70 = sphi 0, %s69
    %s86 = sphi 0, %s70
    %s92 = sphi 0, %s94
    %s95 = sphi 0, %s92
    %s96 = sphi 0, %s95
    %s112 = sphi 0, %s96
  $region4: #{tpu_custom_call.1} parent=0 // loop_header_branch
    %12 = sbr.rel (%p10) target = $region8
  $region5: #{tpu_custom_call.1} parent=0 // loop_body
    %s14 = ssub.s32 %s9, 1
    %s15 = ssub.s32 %s9, 2
    %s16 = sadd.s32 %s9, 1
    %s17 = ssub.s32 %s9, %s16
    %p18 = scmp.eq.s32.totalorder %s17, 0
    %s20 = sadd.s32 %s19, 1
    %s21 = scalar_select %p18, %s19, %s20
    %p24 = pneg %p18
    %p25 = scmp.eq.s32.totalorder %s9, 1
    %p26 = por %p24, %p25
    %p27 = scmp.ne.s32.totalorder %s19, %s22
    %p28 = scmp.eq.s32.totalorder %s9, 0
    %p29 = por %p27, %p28
    %p30 = scmp.ne.s32.totalorder %s19, %s22
    %p31 = scmp.eq.s32.totalorder %s14, 1
    %p32 = por %p30, %p31
    %p33 = scmp.ne.s32.totalorder %s22, %s23
    %p34 = scmp.eq.s32.totalorder %s14, 0
    %p35 = por %p33, %p34
    %p36 = scmp.ne.s32.totalorder %s22, %s23
    %p37 = scmp.eq.s32.totalorder %s15, 1
    %p38 = por %p36, %p37
    %p40 = scmp.ne.s32.totalorder %s23, %s39
    %p41 = scmp.eq.s32.totalorder %s15, 0
    %p42 = por %p40, %p41
    %s44 = sadd.s32 %s43, 1
    %p47 = scmp.eq.s32.totalorder %s9, 1
    %p48 = scmp.ne.s32.totalorder %s43, %s45
    %p49 = scmp.eq.s32.totalorder %s9, 0
    %p50 = por %p48, %p49
    %p51 = scmp.ne.s32.totalorder %s43, %s45
    %p52 = scmp.eq.s32.totalorder %s14, 1
    %p53 = por %p51, %p52
    %p54 = scmp.ne.s32.totalorder %s45, %s46
    %p55 = scmp.eq.s32.totalorder %s14, 0
    %p56 = por %p54, %p55
    %p57 = scmp.ne.s32.totalorder %s45, %s46
    %p58 = scmp.eq.s32.totalorder %s15, 1
    %p59 = por %p57, %p58
    %p61 = scmp.ne.s32.totalorder %s46, %s60
    %p62 = scmp.eq.s32.totalorder %s15, 0
    %p63 = por %p61, %p62
    %s64 = ssub.s32 %s9, %s16
    %p65 = scmp.eq.s32.totalorder %s64, 0
    %s67 = sadd.s32 %s66, 1
    %s68 = scalar_select %p65, %s66, %s67
    %p71 = pneg %p65
    %p72 = scmp.eq.s32.totalorder %s9, 1
    %p73 = por %p71, %p72
    %p74 = scmp.ne.s32.totalorder %s66, %s69
    %p75 = scmp.eq.s32.totalorder %s9, 0
    %p76 = por %p74, %p75
    %p77 = scmp.ne.s32.totalorder %s66, %s69
    %p78 = scmp.eq.s32.totalorder %s14, 1
    %p79 = por %p77, %p78
    %p80 = scmp.ne.s32.totalorder %s69, %s70
    %p81 = scmp.eq.s32.totalorder %s14, 0
    %p82 = por %p80, %p81
    %p83 = scmp.ne.s32.totalorder %s69, %s70
    %p84 = scmp.eq.s32.totalorder %s15, 1
    %p85 = por %p83, %p84
    %p87 = scmp.ne.s32.totalorder %s70, %s86
    %p88 = scmp.eq.s32.totalorder %s15, 0
    %p89 = por %p87, %p88
    %s90 = ssub.s32 %s9, %s16
    %p91 = scmp.eq.s32.totalorder %s90, 0
    %s93 = sadd.s32 %s92, 1
    %s94 = scalar_select %p91, %s92, %s93
    %p97 = pneg %p91
    %p98 = scmp.eq.s32.totalorder %s9, 1
    %p99 = por %p97, %p98
    %p100 = scmp.ne.s32.totalorder %s92, %s95
    %p101 = scmp.eq.s32.totalorder %s9, 0
    %p102 = por %p100, %p101
    %p103 = scmp.ne.s32.totalorder %s92, %s95
    %p104 = scmp.eq.s32.totalorder %s14, 1
    %p105 = por %p103, %p104
    %p106 = scmp.ne.s32.totalorder %s95, %s96
    %p107 = scmp.eq.s32.totalorder %s14, 0
    %p108 = por %p106, %p107
    %p109 = scmp.ne.s32.totalorder %s95, %s96
    %p110 = scmp.eq.s32.totalorder %s15, 1
    %p111 = por %p109, %p110
    %p113 = scmp.ne.s32.totalorder %s96, %s112
    %p114 = scmp.eq.s32.totalorder %s15, 0
    %p115 = por %p113, %p114
    %p116 = scmp.le.s32.totalorder 1, %s9
    %p117 = scmp.lt.s32.totalorder %s9, 3
    %p118 = pnand %p116, %p117
    %p119 = pneg %p118
    // Predicated region
    $region9: #{tpu_custom_call.1} parent=5 // pred_check
      _
    $region10: #{tpu_custom_call.1} parent=5 // pred_check_branch
      %121 = sbr.rel (%p118) target = $region12
    $region11: #{tpu_custom_call.1} parent=5 // pred_region
      %s122 = ssub.s32 %s9, 1
      // Predicated region
      $region13: #{tpu_custom_call.1} parent=11 // pred_check
        %p123 = pneg %p56
      $region14: #{tpu_custom_call.1} parent=11 // pred_check_branch
        %125 = sbr.rel (%p123) target = $region16
      $region15: #{tpu_custom_call.1} parent=11 // pred_region
        _
      $region16: #{tpu_custom_call.1} parent=11 // pred_fallthru
        _
    $region12: #{tpu_custom_call.1} parent=5 // pred_fallthru
      _
    %p126 = scmp.lt.s32.totalorder %s9, 2
    // Predicated region
    $region17: #{tpu_custom_call.1} parent=5 // pred_check
      %p127 = pneg %p126
    $region18: #{tpu_custom_call.1} parent=5 // pred_check_branch
      %129 = sbr.rel (%p127) target = $region20
    $region19: #{tpu_custom_call.1} parent=5 // pred_region
      // Predicated region
      $region21: #{tpu_custom_call.1} parent=19 // pred_check
        %p130 = pneg %p29
      $region22: #{tpu_custom_call.1} parent=19 // pred_check_branch
        %132 = sbr.rel (%p130) target = $region24
      $region23: #{tpu_custom_call.1} parent=19 // pred_region
        %s133 = smul.u32 32, %s9
        %p134 = scmp.lt.s32.totalorder %s133, 63
        %s135 = scalar_select %p134, %s133, 63
        %s136 = smul.addr %s135, 8
        %s137 = scalar_lea.vmem %s0, %s136
        %s138 = smul.u32 32, %s9
      $region24: #{tpu_custom_call.1} parent=19 // pred_fallthru
        _
      // Predicated region
      $region25: #{tpu_custom_call.1} parent=19 // pred_check
        %p139 = pneg %p76
      $region26: #{tpu_custom_call.1} parent=19 // pred_check_branch
        %141 = sbr.rel (%p139) target = $region28
      $region27: #{tpu_custom_call.1} parent=19 // pred_region
        %s142 = smul.u32 32, %s9
        %p143 = scmp.lt.s32.totalorder %s142, 63
        %s144 = scalar_select %p143, %s142, 63
        %s145 = smul.addr %s144, 8
        %s146 = scalar_lea.vmem %s2, %s145
        %s147 = smul.u32 32, %s9
      $region28: #{tpu_custom_call.1} parent=19 // pred_fallthru
        _
    $region20: #{tpu_custom_call.1} parent=5 // pred_fallthru
      _
    %p148 = scmp.le.s32.totalorder 1, %s9
    %p149 = scmp.lt.s32.totalorder %s9, 3
    %p150 = pnand %p148, %p149
    %p151 = pneg %p150
    // Predicated region
    $region29: #{tpu_custom_call.1} parent=5 // pred_check
      _
    $region30: #{tpu_custom_call.1} parent=5 // pred_check_branch
      %153 = sbr.rel (%p150) target = $region32
    $region31: #{tpu_custom_call.1} parent=5 // pred_region
      %s154 = ssub.s32 %s9, 1
      %s155 = smul.u32 32, %s14
      %p156 = scmp.lt.s32.totalorder %s155, 63
      %s157 = scalar_select %p156, %s155, 63
      %s158 = smul.addr %s157, 8
      %s159 = scalar_lea.vmem %s0, %s158
      %p160 = pneg %p35
      %p161 = pneg %p32
      %p162 = pneg %p56
      %p163 = pneg %p53
      %s164 = smul.u32 32, %s14
      %p165 = scmp.lt.s32.totalorder %s164, 63
      %s166 = scalar_select %p165, %s164, 63
      %s167 = smul.addr %s166, 8
      %s168 = scalar_lea.vmem %s2, %s167
      %p169 = pneg %p82
      %p170 = pneg %p79
      %p171 = pneg %p108
      %p172 = pneg %p105
      %s173 = smul.u32 32, %s14
      %p174 = scmp.lt.s32.totalorder %s173, 63
      %s175 = scalar_select %p174, %s173, 63
      %s176 = smul.addr %s175, 8
      %s177 = scalar_lea.vmem %s3, %s176
      %s178 = smul.u32 32, %s14
      %p179 = scmp.lt.s32.totalorder %s178, 63
      %s180 = scalar_select %p179, %s178, 63
      %s181 = smul.addr %s180, 8
      %s182 = scalar_lea.vmem %s0, %s181
      %s183 = smul.u32 32, %s14
      %s184 = smul.u32 32, %s14
      %p185 = scmp.lt.s32.totalorder %s184, 63
      %s186 = scalar_select %p185, %s184, 63
      %s187 = smul.addr %s186, 8
      %s188 = scalar_lea.vmem %s2, %s187
      %s189 = smul.u32 32, %s14
      %s190 = smul.u32 32, %s14
      %p191 = scmp.lt.s32.totalorder %s190, 63
      %s192 = scalar_select %p191, %s190, 63
      %s193 = smul.addr %s192, 8
      %s194 = scalar_lea.vmem %s3, %s193
      %s195 = smul.u32 32, %s14
      %v196 = vld [vmem:[%s182] sm:$0xff]
      %v197 = vld [vmem:[%s182 + $0x8] sm:$0xff]
      %v198 = vld [vmem:[%s182 + $0x10] sm:$0xff]
      %v199 = vld [vmem:[%s182 + $0x18] sm:$0xff]
      %v200 = vld [vmem:[%s182 + $0x20] sm:$0xff]
      %v201 = vld [vmem:[%s182 + $0x28] sm:$0xff]
      %v202 = vld [vmem:[%s182 + $0x30] sm:$0xff]
      %v203 = vld [vmem:[%s182 + $0x38] sm:$0xff]
      %v204 = vld [vmem:[%s182 + $0x40] sm:$0xff]
      %v205 = vld [vmem:[%s182 + $0x48] sm:$0xff]
      %v206 = vld [vmem:[%s182 + $0x50] sm:$0xff]
      %v207 = vld [vmem:[%s182 + $0x58] sm:$0xff]
      %v208 = vld [vmem:[%s182 + $0x60] sm:$0xff]
      %v209 = vld [vmem:[%s182 + $0x68] sm:$0xff]
      %v210 = vld [vmem:[%s182 + $0x70] sm:$0xff]
      %v211 = vld [vmem:[%s182 + $0x78] sm:$0xff]
      %v212 = vld [vmem:[%s182 + $0x80] sm:$0xff]
      %v213 = vld [vmem:[%s182 + $0x88] sm:$0xff]
      %v214 = vld [vmem:[%s182 + $0x90] sm:$0xff]
      %v215 = vld [vmem:[%s182 + $0x98] sm:$0xff]
      %v216 = vld [vmem:[%s182 + $0xa0] sm:$0xff]
      %v217 = vld [vmem:[%s182 + $0xa8] sm:$0xff]
      %v218 = vld [vmem:[%s182 + $0xb0] sm:$0xff]
      %v219 = vld [vmem:[%s182 + $0xb8] sm:$0xff]
      %v220 = vld [vmem:[%s182 + $0xc0] sm:$0xff]
      %v221 = vld [vmem:[%s182 + $0xc8] sm:$0xff]
      %v222 = vld [vmem:[%s182 + $0xd0] sm:$0xff]
      %v223 = vld [vmem:[%s182 + $0xd8] sm:$0xff]
      %v224 = vld [vmem:[%s182 + $0xe0] sm:$0xff]
      %v225 = vld [vmem:[%s182 + $0xe8] sm:$0xff]
      %v226 = vld [vmem:[%s182 + $0xf0] sm:$0xff]
      %v227 = vld [vmem:[%s182 + $0xf8] sm:$0xff]
      %v228 = vld [vmem:[%s1] sm:$0xff]
      %v229 = vld [vmem:[%s1 + $0x8] sm:$0xff]
      %v230 = vld [vmem:[%s1 + $0x10] sm:$0xff]
      %v231 = vld [vmem:[%s1 + $0x18] sm:$0xff]
      %v232 = vld [vmem:[%s1 + $0x20] sm:$0xff]
      %v233 = vld [vmem:[%s1 + $0x28] sm:$0xff]
      %v234 = vld [vmem:[%s1 + $0x30] sm:$0xff]
      %v235 = vld [vmem:[%s1 + $0x38] sm:$0xff]
      %v236 = vld [vmem:[%s188] sm:$0xff]
      %v237 = vld [vmem:[%s188 + $0x8] sm:$0xff]
      %v238 = vld [vmem:[%s188 + $0x10] sm:$0xff]
      %v239 = vld [vmem:[%s188 + $0x18] sm:$0xff]
      %v240 = vld [vmem:[%s188 + $0x20] sm:$0xff]
      %v241 = vld [vmem:[%s188 + $0x28] sm:$0xff]
      %v242 = vld [vmem:[%s188 + $0x30] sm:$0xff]
      %v243 = vld [vmem:[%s188 + $0x38] sm:$0xff]
      %v244 = vld [vmem:[%s188 + $0x40] sm:$0xff]
      %v245 = vld [vmem:[%s188 + $0x48] sm:$0xff]
      %v246 = vld [vmem:[%s188 + $0x50] sm:$0xff]
      %v247 = vld [vmem:[%s188 + $0x58] sm:$0xff]
      %v248 = vld [vmem:[%s188 + $0x60] sm:$0xff]
      %v249 = vld [vmem:[%s188 + $0x68] sm:$0xff]
      %v250 = vld [vmem:[%s188 + $0x70] sm:$0xff]
      %v251 = vld [vmem:[%s188 + $0x78] sm:$0xff]
      %v252 = vld [vmem:[%s188 + $0x80] sm:$0xff]
      %v253 = vld [vmem:[%s188 + $0x88] sm:$0xff]
      %v254 = vld [vmem:[%s188 + $0x90] sm:$0xff]
      %v255 = vld [vmem:[%s188 + $0x98] sm:$0xff]
      %v256 = vld [vmem:[%s188 + $0xa0] sm:$0xff]
      %v257 = vld [vmem:[%s188 + $0xa8] sm:$0xff]
      %v258 = vld [vmem:[%s188 + $0xb0] sm:$0xff]
      %v259 = vld [vmem:[%s188 + $0xb8] sm:$0xff]
      %v260 = vld [vmem:[%s188 + $0xc0] sm:$0xff]
      %v261 = vld [vmem:[%s188 + $0xc8] sm:$0xff]
      %v262 = vld [vmem:[%s188 + $0xd0] sm:$0xff]
      %v263 = vld [vmem:[%s188 + $0xd8] sm:$0xff]
      %v264 = vld [vmem:[%s188 + $0xe0] sm:$0xff]
      %v265 = vld [vmem:[%s188 + $0xe8] sm:$0xff]
      %v266 = vld [vmem:[%s188 + $0xf0] sm:$0xff]
      %v267 = vld [vmem:[%s188 + $0xf8] sm:$0xff]
      %vm268 = vcmask 523264
      %v270 = vsel %vm268, %v196, 0
      %v273 = vsel %vm268, %v197, 0
      %v276 = vsel %vm268, %v198, 0
      %v279 = vsel %vm268, %v199, 0
      %v282 = vsel %vm268, %v200, 0
      %v285 = vsel %vm268, %v201, 0
      %v288 = vsel %vm268, %v202, 0
      %v291 = vsel %vm268, %v203, 0
      %v294 = vsel %vm268, %v204, 0
      %v297 = vsel %vm268, %v205, 0
      %v300 = vsel %vm268, %v206, 0
      %v303 = vsel %vm268, %v207, 0
      %v306 = vsel %vm268, %v208, 0
      %v309 = vsel %vm268, %v209, 0
      %v312 = vsel %vm268, %v210, 0
      %v315 = vsel %vm268, %v211, 0
      %v318 = vsel %vm268, %v212, 0
      %v321 = vsel %vm268, %v213, 0
      %v324 = vsel %vm268, %v214, 0
      %v327 = vsel %vm268, %v215, 0
      %v330 = vsel %vm268, %v216, 0
      %v333 = vsel %vm268, %v217, 0
      %v336 = vsel %vm268, %v218, 0
      %v339 = vsel %vm268, %v219, 0
      %v342 = vsel %vm268, %v220, 0
      %v345 = vsel %vm268, %v221, 0
      %v348 = vsel %vm268, %v222, 0
      %v351 = vsel %vm268, %v223, 0
      %v354 = vsel %vm268, %v224, 0
      %v357 = vsel %vm268, %v225, 0
      %v360 = vsel %vm268, %v226, 0
      %v363 = vsel %vm268, %v227, 0
      %365 = vmatpush.msra.mxu0 0.0
      %366 = vmatpush.msra.mxu0 0.0
      %367 = vmatpush.msra.mxu0 0.0
      %368 = vmatpush.msra.mxu0 0.0
      %369 = vmatpush.msra.mxu0 0.0
      %370 = vmatpush.msra.mxu0 0.0
      %371 = vmatpush.msra.mxu0 0.0
      %372 = vmatpush.msra.mxu0 0.0
      %373 = vmatpush.msra.mxu0 %v235
      %374 = vmatpush.msra.mxu0 %v234
      %375 = vmatpush.msra.mxu0 %v233
      %376 = vmatpush.msra.mxu0 %v232
      %377 = vmatpush.msra.mxu0 %v231
      %378 = vmatpush.msra.mxu0 %v230
      %379 = vmatpush.msra.mxu0 %v229
      %380 = vmatpush.msra.mxu0 %v228
      %381 = vmatmul.f32.gmra.mxu0 %v270
      %v382 = vpop.f32.mrf.mxu0
      %v383 = vadd.f32 %v236, %v382
      %384 = vmatmul.f32.gmra.mxu0 %v273
      %v385 = vpop.f32.mrf.mxu0
      %v386 = vadd.f32 %v237, %v385
      %387 = vmatmul.f32.gmra.mxu0 %v276
      %v388 = vpop.f32.mrf.mxu0
      %v389 = vadd.f32 %v238, %v388
      %390 = vmatmul.f32.gmra.mxu0 %v279
      %v391 = vpop.f32.mrf.mxu0
      %v392 = vadd.f32 %v239, %v391
      %393 = vmatmul.f32.gmra.mxu0 %v282
      %v394 = vpop.f32.mrf.mxu0
      %v395 = vadd.f32 %v240, %v394
      %396 = vmatmul.f32.gmra.mxu0 %v285
      %v397 = vpop.f32.mrf.mxu0
      %v398 = vadd.f32 %v241, %v397
      %399 = vmatmul.f32.gmra.mxu0 %v288
      %v400 = vpop.f32.mrf.mxu0
      %v401 = vadd.f32 %v242, %v400
      %402 = vmatmul.f32.gmra.mxu0 %v291
      %v403 = vpop.f32.mrf.mxu0
      %v404 = vadd.f32 %v243, %v403
      %405 = vmatmul.f32.gmra.mxu0 %v294
      %v406 = vpop.f32.mrf.mxu0
      %v407 = vadd.f32 %v244, %v406
      %408 = vmatmul.f32.gmra.mxu0 %v297
      %v409 = vpop.f32.mrf.mxu0
      %v410 = vadd.f32 %v245, %v409
      %411 = vmatmul.f32.gmra.mxu0 %v300
      %v412 = vpop.f32.mrf.mxu0
      %v413 = vadd.f32 %v246, %v412
      %414 = vmatmul.f32.gmra.mxu0 %v303
      %v415 = vpop.f32.mrf.mxu0
      %v416 = vadd.f32 %v247, %v415
      %417 = vmatmul.f32.gmra.mxu0 %v306
      %v418 = vpop.f32.mrf.mxu0
      %v419 = vadd.f32 %v248, %v418
      %420 = vmatmul.f32.gmra.mxu0 %v309
      %v421 = vpop.f32.mrf.mxu0
      %v422 = vadd.f32 %v249, %v421
      %423 = vmatmul.f32.gmra.mxu0 %v312
      %v424 = vpop.f32.mrf.mxu0
      %v425 = vadd.f32 %v250, %v424
      %426 = vmatmul.f32.gmra.mxu0 %v315
      %v427 = vpop.f32.mrf.mxu0
      %v428 = vadd.f32 %v251, %v427
      %429 = vmatmul.f32.gmra.mxu0 %v318
      %v430 = vpop.f32.mrf.mxu0
      %v431 = vadd.f32 %v252, %v430
      %432 = vmatmul.f32.gmra.mxu0 %v321
      %v433 = vpop.f32.mrf.mxu0
      %v434 = vadd.f32 %v253, %v433
      %435 = vmatmul.f32.gmra.mxu0 %v324
      %v436 = vpop.f32.mrf.mxu0
      %v437 = vadd.f32 %v254, %v436
      %438 = vmatmul.f32.gmra.mxu0 %v327
      %v439 = vpop.f32.mrf.mxu0
      %v440 = vadd.f32 %v255, %v439
      %441 = vmatmul.f32.gmra.mxu0 %v330
      %v442 = vpop.f32.mrf.mxu0
      %v443 = vadd.f32 %v256, %v442
      %444 = vmatmul.f32.gmra.mxu0 %v333
      %v445 = vpop.f32.mrf.mxu0
      %v446 = vadd.f32 %v257, %v445
      %447 = vmatmul.f32.gmra.mxu0 %v336
      %v448 = vpop.f32.mrf.mxu0
      %v449 = vadd.f32 %v258, %v448
      %450 = vmatmul.f32.gmra.mxu0 %v339
      %v451 = vpop.f32.mrf.mxu0
      %v452 = vadd.f32 %v259, %v451
      %453 = vmatmul.f32.gmra.mxu0 %v342
      %v454 = vpop.f32.mrf.mxu0
      %v455 = vadd.f32 %v260, %v454
      %456 = vmatmul.f32.gmra.mxu0 %v345
      %v457 = vpop.f32.mrf.mxu0
      %v458 = vadd.f32 %v261, %v457
      %459 = vmatmul.f32.gmra.mxu0 %v348
      %v460 = vpop.f32.mrf.mxu0
      %v461 = vadd.f32 %v262, %v460
      %462 = vmatmul.f32.gmra.mxu0 %v351
      %v463 = vpop.f32.mrf.mxu0
      %v464 = vadd.f32 %v263, %v463
      %465 = vmatmul.f32.gmra.mxu0 %v354
      %v466 = vpop.f32.mrf.mxu0
      %v467 = vadd.f32 %v264, %v466
      %468 = vmatmul.f32.gmra.mxu0 %v357
      %v469 = vpop.f32.mrf.mxu0
      %v470 = vadd.f32 %v265, %v469
      %471 = vmatmul.f32.gmra.mxu0 %v360
      %v472 = vpop.f32.mrf.mxu0
      %v473 = vadd.f32 %v266, %v472
      %474 = vmatmul.f32.gmra.mxu0 %v363
      %v475 = vpop.f32.mrf.mxu0
      %v476 = vadd.f32 %v267, %v475
      %477 = vdwg.mxu0
      %vm478 = vcmask 261120
      %479 = vst.msk [vmem:[%s194] sm:$0xff] %vm478, %v383
      %480 = vst.msk [vmem:[%s194 + $0x8] sm:$0xff] %vm478, %v386
      %481 = vst.msk [vmem:[%s194 + $0x10] sm:$0xff] %vm478, %v389
      %482 = vst.msk [vmem:[%s194 + $0x18] sm:$0xff] %vm478, %v392
      %483 = vst.msk [vmem:[%s194 + $0x20] sm:$0xff] %vm478, %v395
      %484 = vst.msk [vmem:[%s194 + $0x28] sm:$0xff] %vm478, %v398
      %485 = vst.msk [vmem:[%s194 + $0x30] sm:$0xff] %vm478, %v401
      %486 = vst.msk [vmem:[%s194 + $0x38] sm:$0xff] %vm478, %v404
      %487 = vst.msk [vmem:[%s194 + $0x40] sm:$0xff] %vm478, %v407
      %488 = vst.msk [vmem:[%s194 + $0x48] sm:$0xff] %vm478, %v410
      %489 = vst.msk [vmem:[%s194 + $0x50] sm:$0xff] %vm478, %v413
      %490 = vst.msk [vmem:[%s194 + $0x58] sm:$0xff] %vm478, %v416
      %491 = vst.msk [vmem:[%s194 + $0x60] sm:$0xff] %vm478, %v419
      %492 = vst.msk [vmem:[%s194 + $0x68] sm:$0xff] %vm478, %v422
      %493 = vst.msk [vmem:[%s194 + $0x70] sm:$0xff] %vm478, %v425
      %494 = vst.msk [vmem:[%s194 + $0x78] sm:$0xff] %vm478, %v428
      %495 = vst.msk [vmem:[%s194 + $0x80] sm:$0xff] %vm478, %v431
      %496 = vst.msk [vmem:[%s194 + $0x88] sm:$0xff] %vm478, %v434
      %497 = vst.msk [vmem:[%s194 + $0x90] sm:$0xff] %vm478, %v437
      %498 = vst.msk [vmem:[%s194 + $0x98] sm:$0xff] %vm478, %v440
      %499 = vst.msk [vmem:[%s194 + $0xa0] sm:$0xff] %vm478, %v443
      %500 = vst.msk [vmem:[%s194 + $0xa8] sm:$0xff] %vm478, %v446
      %501 = vst.msk [vmem:[%s194 + $0xb0] sm:$0xff] %vm478, %v449
      %502 = vst.msk [vmem:[%s194 + $0xb8] sm:$0xff] %vm478, %v452
      %503 = vst.msk [vmem:[%s194 + $0xc0] sm:$0xff] %vm478, %v455
      %504 = vst.msk [vmem:[%s194 + $0xc8] sm:$0xff] %vm478, %v458
      %505 = vst.msk [vmem:[%s194 + $0xd0] sm:$0xff] %vm478, %v461
      %506 = vst.msk [vmem:[%s194 + $0xd8] sm:$0xff] %vm478, %v464
      %507 = vst.msk [vmem:[%s194 + $0xe0] sm:$0xff] %vm478, %v467
      %508 = vst.msk [vmem:[%s194 + $0xe8] sm:$0xff] %vm478, %v470
      %509 = vst.msk [vmem:[%s194 + $0xf0] sm:$0xff] %vm478, %v473
      %510 = vst.msk [vmem:[%s194 + $0xf8] sm:$0xff] %vm478, %v476
      %s511 = smul.u32 32, %s14
      %p512 = scmp.lt.s32.totalorder %s511, 63
      %s513 = scalar_select %p512, %s511, 63
      %s514 = smul.addr %s513, 8
      %s515 = scalar_lea.vmem %s3, %s514
      // Predicated region
      $region33: #{tpu_custom_call.1} parent=31 // pred_check
        %p516 = pneg %p105
      $region34: #{tpu_custom_call.1} parent=31 // pred_check_branch
        %518 = sbr.rel (%p516) target = $region36
      $region35: #{tpu_custom_call.1} parent=31 // pred_region
        %s519 = smul.u32 32, %s14
      $region36: #{tpu_custom_call.1} parent=31 // pred_fallthru
        _
    $region32: #{tpu_custom_call.1} parent=5 // pred_fallthru
      _
    %p520 = scmp.le.s32.totalorder 2, %s9
    // Predicated region
    $region37: #{tpu_custom_call.1} parent=5 // pred_check
      %p521 = pneg %p520
    $region38: #{tpu_custom_call.1} parent=5 // pred_check_branch
      %523 = sbr.rel (%p521) target = $region40
    $region39: #{tpu_custom_call.1} parent=5 // pred_region
      %s524 = ssub.s32 %s9, 2
      // Predicated region
      $region41: #{tpu_custom_call.1} parent=39 // pred_check
        %p525 = pneg %p111
      $region42: #{tpu_custom_call.1} parent=39 // pred_check_branch
        %527 = sbr.rel (%p525) target = $region44
      $region43: #{tpu_custom_call.1} parent=39 // pred_region
        %s528 = smul.u32 32, %s15
        %p529 = scmp.lt.s32.totalorder %s528, 63
        %s530 = scalar_select %p529, %s528, 63
        %s531 = smul.addr %s530, 8
        %s532 = scalar_lea.vmem %s3, %s531
      $region44: #{tpu_custom_call.1} parent=39 // pred_fallthru
        _
    $region40: #{tpu_custom_call.1} parent=5 // pred_fallthru
      _
  $region6: #{tpu_custom_call.1} parent=0 // loop_footer
    %s13 = sadd.s32 1, %s9
  $region7: #{tpu_custom_call.1} parent=0 // loop_footer_branch
    %8 = sbr.rel target = $region3
  $region8: #{tpu_custom_call.1} parent=0 // loop_exit
    _

</llo_original>
